<compile_context>
chip_gen: v7x
topology: tpu7x:2x2x1
jax: 0.10.0
libtpu: 0.0.40
codegen_flags: <defaults>
</compile_context>

<pallas_src>
import functools

import jax
import jax.numpy as jnp
from jax.experimental import pallas as pl
from jax.experimental.pallas import tpu as pltpu

LANES = 128                          # lane width (minor dim)
MIN_STEPS = 4                        # >= 2 grid steps per TC on v7x when splittable
TARGET_BLOCK_BYTES = 6 * 1024 * 1024  # 12 MiB double-buffered -> fits v5e/v6e/v7x defaults


def _cdiv(a, b):
    return -(-a // b)


def _round_up(a, b):
    return _cdiv(a, b) * b


def _sat_kernel(pivot_ref, x_ref, out_ref, *, tr, group, unroll, rows, need_mask):
    """pivot_ref: (2,) f32 in SMEM; x_ref: (1, 3, tr, 128) native dtype;
    out_ref: (1, 1, 4, group, 128) f32 partial sums (rg, rg^2, yb, yb^2)."""
    p_rg = pivot_ref[0]
    p_yb = pivot_ref[1]

    if need_mask:
        # Rows of this tile that hold real (or zero-padded) data; beyond that the
        # partial-block contents are unspecified and must be masked out.
        valid = rows - pl.program_id(1) * tr
        row_idx = jax.lax.broadcasted_iota(jnp.int32, (group, LANES), 0)

    chunk = group * unroll

    def body(i, carry):
        s_rg, s_rg2, s_yb, s_yb2 = carry
        for u in range(unroll):                       # static unroll inside fori_loop
            off = pl.multiple_of(i * chunk + u * group, group)
            r = x_ref[0, 0, pl.ds(off, group), :].astype(jnp.float32)
            g = x_ref[0, 1, pl.ds(off, group), :].astype(jnp.float32)
            b = x_ref[0, 2, pl.ds(off, group), :].astype(jnp.float32)
            rg = (r - g) - p_rg
            yb = (0.5 * (r + g) - b) - p_yb
            if need_mask:
                m = row_idx < (valid - off)
                rg = jnp.where(m, rg, 0.0)
                yb = jnp.where(m, yb, 0.0)
            s_rg = s_rg + rg
            s_rg2 = s_rg2 + rg * rg
            s_yb = s_yb + yb
            s_yb2 = s_yb2 + yb * yb
        return s_rg, s_rg2, s_yb, s_yb2

    zero = jnp.zeros((group, LANES), jnp.float32)
    s_rg, s_rg2, s_yb, s_yb2 = jax.lax.fori_loop(
        0, tr // chunk, body, (zero, zero, zero, zero))

    out_ref[0, 0, 0] = s_rg
    out_ref[0, 0, 1] = s_rg2
    out_ref[0, 0, 2] = s_yb
    out_ref[0, 0, 3] = s_yb2


@jax.jit
def saturation_loss(img):
    """img: (N, 3, H, W) NCHW, any float dtype — matches the PyTorch module."""
    n_b, c, h, w = img.shape
    assert c == 3, "SaturationLoss expects 3-channel input"
    if not jnp.issubdtype(img.dtype, jnp.floating):
        img = img.astype(jnp.float32)
    itemsize = jnp.dtype(img.dtype).itemsize
    group = {4: 8, 2: 16, 1: 32}.get(itemsize, 8)     # respects (8/16/32,128) packing

    hw = h * w
    rows = max(_cdiv(hw, LANES), group)               # per-sample 128-lane rows
    pad = rows * LANES - hw                           # 0 in the common lane-aligned case

    x = img.reshape(n_b, 3, hw)
    if pad:
        x = jnp.pad(x, ((0, 0), (0, 0), (0, pad)))    # small; only for ragged/tiny HW
    x = x.reshape(n_b, 3, rows, LANES)                # free reshape, no transpose

    # Coarse pivot from a tiny slice (conditions the sum-of-squares accumulation).
    samp = img[0, :, : min(8, h), :].astype(jnp.float32)   # (3, <=8, W)
    m = jnp.mean(samp, axis=(1, 2))
    p_rg = m[0] - m[1]
    p_yb = 0.5 * (m[0] + m[1]) - m[2]
    pivots = jnp.stack([p_rg, p_yb])                  # (2,) f32 -> SMEM

    # --- static tile geometry ---
    tr_cap = (rows // group) * group                  # never exceed the array's row dim
    tr = min(max(group, (TARGET_BLOCK_BYTES // (3 * LANES * itemsize)) // group * group),
             tr_cap)
    if n_b * _cdiv(rows, tr) < MIN_STEPS:             # give v7x both TCs work
        tr = min(tr_cap,
                 max(group, _round_up(_cdiv(rows, _cdiv(MIN_STEPS, n_b)), group)))
    num_tiles = _cdiv(rows, tr)
    need_mask = (rows % tr) != 0

    groups = tr // group
    unroll = 8
    while groups % unroll:
        unroll -= 1

    kernel = functools.partial(_sat_kernel, tr=tr, group=group, unroll=unroll,
                               rows=rows, need_mask=need_mask)

    parts = pl.pallas_call(
        kernel,
        out_shape=jax.ShapeDtypeStruct((n_b, num_tiles, 4, group, LANES), jnp.float32),
        grid=(n_b, num_tiles),
        in_specs=[pl.BlockSpec(memory_space=pltpu.MemorySpace.SMEM),
                  pl.BlockSpec((1, 3, tr, LANES), lambda n, t: (n, 0, t, 0))],
        out_specs=pl.BlockSpec((1, 1, 4, group, LANES),
                               lambda n, t: (n, t, 0, 0, 0)),
        compiler_params=pltpu.CompilerParams(
            dimension_semantics=("parallel", "parallel")),
    )(pivots, x)

    # Tiny finalize in the wrapper (keeps both grid axes fully parallel).
    sums = jnp.sum(parts, axis=(0, 1, 3, 4))          # (4,)
    s_rg, s_rg2, s_yb, s_yb2 = sums[0], sums[1], sums[2], sums[3]

    # Remove the exactly-known contribution of zero-padded pixels
    # (each contributes -pivot to the sum and pivot^2 to the sum of squares).
    n_pad = jnp.float32(n_b * pad)
    s_rg = s_rg + n_pad * p_rg
    s_rg2 = s_rg2 - n_pad * p_rg * p_rg
    s_yb = s_yb + n_pad * p_yb
    s_yb2 = s_yb2 - n_pad * p_yb * p_yb

    n = jnp.float32(n_b * hw)
    mean_rg = p_rg + s_rg / n
    mean_yb = p_yb + s_yb / n
    # Unbiased variance (torch.std_mean default, correction=1), centered at pivot.
    var_rg = (s_rg2 - s_rg * s_rg / n) / (n - 1.0)
    var_yb = (s_yb2 - s_yb * s_yb / n) / (n - 1.0)
    var_rg = jnp.maximum(var_rg, 0.0)   # guard tiny negatives from f32 rounding only
    var_yb = jnp.maximum(var_yb, 0.0)

    std_rggb = jnp.sqrt(var_rg + var_yb)
    mean_rggb = jnp.sqrt(mean_rg * mean_rg + mean_yb * mean_yb)
    colorfulness = std_rggb + 0.3 * mean_rggb
    return -(colorfulness * 0.1) / 10.0


def _reference(img):
    x = img.astype(jnp.float32)
    pixels = jnp.transpose(x, (0, 2, 3, 1)).reshape(-1, 3)
    rg = pixels[:, 0] - pixels[:, 1]
    yb = 0.5 * (pixels[:, 0] + pixels[:, 1]) - pixels[:, 2]
    rg_std = jnp.std(rg, ddof=1)
    yb_std = jnp.std(yb, ddof=1)
    rg_mean = jnp.mean(rg)
    yb_mean = jnp.mean(yb)
    std_rggb = jnp.sqrt(rg_std ** 2 + yb_std ** 2)
    mean_rggb = jnp.sqrt(rg_mean ** 2 + yb_mean ** 2)
    colorfulness = std_rggb + 0.3 * mean_rggb
    return -(colorfulness * 0.1) / 10.0


if __name__ == "__main__":
    key = jax.random.PRNGKey(0)
    cases = [
        ((2, 3, 32, 32), jnp.float32),    # clean path: no pad, no mask, 2 grid steps
        ((1, 3, 64, 80), jnp.float32),    # ragged tiling: partial last block -> in-kernel mask
        ((1, 3, 24, 24), jnp.float32),    # lane padding + zero-pixel correction
        ((2, 3, 32, 64), jnp.bfloat16),   # bf16 ingest with (16,128) groups
    ]
    ok = True
    for shape, dt in cases:
        key, sub = jax.random.split(key)
        img = (jax.random.normal(sub, shape, dtype=jnp.float32) * 0.5 + 0.5).astype(dt)
        out = jax.block_until_ready(saturation_loss(img))
        ref = _reference(img)
        if not jnp.allclose(out, ref, atol=1e-4, rtol=1e-4):
            ok = False
            print("MISMATCH", shape, str(dt), float(out), float(ref))
    if ok:
        print("KERNEL_OK")
</pallas_src>

<mosaic_0001>
module attributes {stable_mosaic.version = 11 : i64} {
  func.func @_sat_kernel(%arg0: i32, %arg1: i32, %arg2: memref<2xf32, #tpu.memory_space<smem>>, %arg3: memref<1x3x8x128xf32, #tpu.memory_space<vmem>>, %arg4: memref<1x1x4x8x128xf32, #tpu.memory_space<vmem>>) attributes {dimension_semantics = [#tpu.dimension_semantics<parallel>, #tpu.dimension_semantics<parallel>], iteration_bounds = array<i64: 2, 1>, scalar_prefetch = 0 : i64, scratch_operands = 0 : i64, tpu.core_type = #tpu.core_type<tc>, window_params = [{transform_indices = @transform_0, window_bounds = array<i64: 2>}, {transform_indices = @transform_1, window_bounds = array<i64: 1, 3, 8, 128>}, {transform_indices = @transform_2, window_bounds = array<i64: 1, 1, 4, 8, 128>}]} {
    %c0 = arith.constant 0 : index
    %0 = memref.load %arg2[%c0] : memref<2xf32, #tpu.memory_space<smem>>
    %c1 = arith.constant 1 : index
    %1 = memref.load %arg2[%c1] : memref<2xf32, #tpu.memory_space<smem>>
    %cst = arith.constant 0.000000e+00 : f32
    %2 = vector.broadcast %cst : f32 to vector<8x128xf32>
    %c0_i32 = arith.constant 0 : i32
    %c8_i32 = arith.constant 8 : i32
    %3 = arith.muli %c0_i32, %c8_i32 : i32
    %c0_i32_0 = arith.constant 0 : i32
    %4 = arith.addi %3, %c0_i32_0 : i32
    %5 = tpu.assume_multiple %4, 8 : i32
    %c0_1 = arith.constant 0 : index
    %c0_2 = arith.constant 0 : index
    %6 = arith.index_cast %5 : i32 to index
    %c0_3 = arith.constant 0 : index
    %7 = vector.load %arg3[%c0_1, %c0_2, %6, %c0_3] : memref<1x3x8x128xf32, #tpu.memory_space<vmem>>, vector<1x1x8x128xf32>
    %8 = vector.shape_cast %7 : vector<1x1x8x128xf32> to vector<8x128xf32>
    %c0_4 = arith.constant 0 : index
    %c1_5 = arith.constant 1 : index
    %9 = arith.index_cast %5 : i32 to index
    %c0_6 = arith.constant 0 : index
    %10 = vector.load %arg3[%c0_4, %c1_5, %9, %c0_6] : memref<1x3x8x128xf32, #tpu.memory_space<vmem>>, vector<1x1x8x128xf32>
    %11 = vector.shape_cast %10 : vector<1x1x8x128xf32> to vector<8x128xf32>
    %c0_7 = arith.constant 0 : index
    %c2 = arith.constant 2 : index
    %12 = arith.index_cast %5 : i32 to index
    %c0_8 = arith.constant 0 : index
    %13 = vector.load %arg3[%c0_7, %c2, %12, %c0_8] : memref<1x3x8x128xf32, #tpu.memory_space<vmem>>, vector<1x1x8x128xf32>
    %14 = vector.shape_cast %13 : vector<1x1x8x128xf32> to vector<8x128xf32>
    %15 = arith.subf %8, %11 : vector<8x128xf32>
    %16 = vector.broadcast %0 : f32 to vector<8x128xf32>
    %17 = arith.subf %15, %16 : vector<8x128xf32>
    %18 = arith.addf %8, %11 : vector<8x128xf32>
    %cst_9 = arith.constant 5.000000e-01 : f32
    %19 = vector.broadcast %cst_9 : f32 to vector<8x128xf32>
    %20 = arith.mulf %19, %18 : vector<8x128xf32>
    %21 = arith.subf %20, %14 : vector<8x128xf32>
    %22 = vector.broadcast %1 : f32 to vector<8x128xf32>
    %23 = arith.subf %21, %22 : vector<8x128xf32>
    %24 = arith.addf %2, %17 : vector<8x128xf32>
    %25 = arith.mulf %17, %17 : vector<8x128xf32>
    %26 = arith.addf %2, %25 : vector<8x128xf32>
    %27 = arith.addf %2, %23 : vector<8x128xf32>
    %28 = arith.mulf %23, %23 : vector<8x128xf32>
    %29 = arith.addf %2, %28 : vector<8x128xf32>
    %c1_i32 = arith.constant 1 : i32
    %c0_10 = arith.constant 0 : index
    %c0_11 = arith.constant 0 : index
    %c0_12 = arith.constant 0 : index
    %c0_13 = arith.constant 0 : index
    %c0_14 = arith.constant 0 : index
    %30 = vector.load %arg4[%c0_10, %c0_11, %c0_12, %c0_13, %c0_14] : memref<1x1x4x8x128xf32, #tpu.memory_space<vmem>>, vector<1x1x1x8x128xf32>
    %31 = vector.shape_cast %30 : vector<1x1x1x8x128xf32> to vector<8x128xf32>
    %32 = vector.shape_cast %24 : vector<8x128xf32> to vector<1x1x1x8x128xf32>
    tpu.vector_store %arg4[%c0_10, %c0_11, %c0_12, %c0_13, %c0_14], %32 {strides = array<i32>} : memref<1x1x4x8x128xf32, #tpu.memory_space<vmem>>, vector<1x1x1x8x128xf32>,
    %c0_15 = arith.constant 0 : index
    %c0_16 = arith.constant 0 : index
    %c1_17 = arith.constant 1 : index
    %c0_18 = arith.constant 0 : index
    %c0_19 = arith.constant 0 : index
    %33 = vector.load %arg4[%c0_15, %c0_16, %c1_17, %c0_18, %c0_19] : memref<1x1x4x8x128xf32, #tpu.memory_space<vmem>>, vector<1x1x1x8x128xf32>
    %34 = vector.shape_cast %33 : vector<1x1x1x8x128xf32> to vector<8x128xf32>
    %35 = vector.shape_cast %26 : vector<8x128xf32> to vector<1x1x1x8x128xf32>
    tpu.vector_store %arg4[%c0_15, %c0_16, %c1_17, %c0_18, %c0_19], %35 {strides = array<i32>} : memref<1x1x4x8x128xf32, #tpu.memory_space<vmem>>, vector<1x1x1x8x128xf32>,
    %c0_20 = arith.constant 0 : index
    %c0_21 = arith.constant 0 : index
    %c2_22 = arith.constant 2 : index
    %c0_23 = arith.constant 0 : index
    %c0_24 = arith.constant 0 : index
    %36 = vector.load %arg4[%c0_20, %c0_21, %c2_22, %c0_23, %c0_24] : memref<1x1x4x8x128xf32, #tpu.memory_space<vmem>>, vector<1x1x1x8x128xf32>
    %37 = vector.shape_cast %36 : vector<1x1x1x8x128xf32> to vector<8x128xf32>
    %38 = vector.shape_cast %27 : vector<8x128xf32> to vector<1x1x1x8x128xf32>
    tpu.vector_store %arg4[%c0_20, %c0_21, %c2_22, %c0_23, %c0_24], %38 {strides = array<i32>} : memref<1x1x4x8x128xf32, #tpu.memory_space<vmem>>, vector<1x1x1x8x128xf32>,
    %c0_25 = arith.constant 0 : index
    %c0_26 = arith.constant 0 : index
    %c3 = arith.constant 3 : index
    %c0_27 = arith.constant 0 : index
    %c0_28 = arith.constant 0 : index
    %39 = vector.load %arg4[%c0_25, %c0_26, %c3, %c0_27, %c0_28] : memref<1x1x4x8x128xf32, #tpu.memory_space<vmem>>, vector<1x1x1x8x128xf32>
    %40 = vector.shape_cast %39 : vector<1x1x1x8x128xf32> to vector<8x128xf32>
    %41 = vector.shape_cast %29 : vector<8x128xf32> to vector<1x1x1x8x128xf32>
    tpu.vector_store %arg4[%c0_25, %c0_26, %c3, %c0_27, %c0_28], %41 {strides = array<i32>} : memref<1x1x4x8x128xf32, #tpu.memory_space<vmem>>, vector<1x1x1x8x128xf32>,
    return
  }
  func.func @transform_0(%arg0: i32, %arg1: i32) -> i32 {
    %c0_i32 = arith.constant 0 : i32
    %c0_i32_0 = arith.constant 0 : i32
    return %c0_i32 : i32
  }
  func.func @transform_1(%arg0: i32, %arg1: i32) -> (i32, i32, i32, i32) {
    %c0_i32 = arith.constant 0 : i32
    %c0_i32_0 = arith.constant 0 : i32
    %c0_i32_1 = arith.constant 0 : i32
    return %arg0, %c0_i32, %arg1, %c0_i32_0 : i32, i32, i32, i32
  }
  func.func @transform_2(%arg0: i32, %arg1: i32) -> (i32, i32, i32, i32, i32) {
    %c0_i32 = arith.constant 0 : i32
    %c0_i32_0 = arith.constant 0 : i32
    %c0_i32_1 = arith.constant 0 : i32
    %c0_i32_2 = arith.constant 0 : i32
    return %arg0, %arg1, %c0_i32, %c0_i32_0, %c0_i32_1 : i32, i32, i32, i32, i32
  }
}

</mosaic_0001>

<llo_original>
// kernel: saturation_loss.1
$region0: #{saturation_loss.1}
  #allocation0 [shape = 'u32[]', space=smem, size = 0x4, offset = 0x4, fixed_abs, tag = 'smem constant byte address 0x4 - core index']
  #allocation1 [shape = 'u32[144,128]{1,0:T(1,128)}', space=vmem, size = 0x12000, scoped, tag = 'internal scratch']
  %s0 = inlined_call_operand.vmem [shape: f32[2], index: 0, kind: input, shape index: {}]
  %s1 = inlined_call_operand.vmem [shape: f32[2,3,8,128], index: 1, kind: input, shape index: {}]
  %s2 = inlined_call_operand.vmem [shape: f32[2,1,4,8,128], index: 2, kind: output, shape index: {}]
  %s3 = sld [smem:[#allocation0]]
  $region45: #{saturation_loss.1} parent=0
    _
  %s5 = ssub.s32 1, %s3
  %s6 = scalar_select 0, %s5, %s3
  $region1: #{saturation_loss.1} parent=0
    #allocation2 [shape = 'u8[512]{0}', space=smem, size = 0x200, scoped, tag = 'input window, operand 0, single buffered']
    #allocation3 [shape = 's32[2]{0}', space=sflag, size = 0x8, scoped, tag = 'scoped memory for saturation_loss.1']
    %7 = vsyncpa [#allocation3], 0
    loop: start=0, step=1, limit=4
    $region2: #{saturation_loss.1} parent=1 // loop_pre_header
      _
    $region3: #{saturation_loss.1} parent=1 // loop_header
      %s9 = sphi 0, %s13
      %p10 = scmp.ge.s32.totalorder %s9, 4
      %s16 = sphi 0, %s28
      %s17 = sphi 0, %s24
      %s18 = sphi 0, %s16
      %s19 = sphi 0, %s17
      %s20 = sphi 0, %s18
      %s21 = sphi 0, %s19
      %s29 = sphi 0, %s29
      %s31 = sphi 0, %s29
      %s32 = sphi 0, %s31
      %s46 = sphi 0, %s32
      %s54 = sphi 0, %s56
      %s57 = sphi 0, %s54
      %s58 = sphi 0, %s57
      %s74 = sphi 0, %s58
      %s82 = sphi 0, %s84
      %s85 = sphi 0, %s82
      %s86 = sphi 0, %s85
      %s102 = sphi 0, %s86
    $region4: #{saturation_loss.1} parent=1 // loop_header_branch
      %12 = sbr.rel (%p10) target = $region8
    $region5: #{saturation_loss.1} parent=1 // loop_body
      %s14 = ssub.s32 %s9, 1
      %s15 = ssub.s32 %s9, 2
      %s22 = sadd.s32 1, %s17
      %p23 = scmp.ge.s32.totalorder %s22, 1
      %s24 = scalar_select %p23, 0, %s22
      %s25 = sadd.s32 1, %s16
      %s26 = scalar_select %p23, %s25, %s16
      %p27 = scmp.ge.s32.totalorder %s26, 2
      %s28 = scalar_select %p27, 0, %s26
      %s30 = sadd.s32 %s29, 1
      %p33 = scmp.eq.s32.totalorder %s9, 1
      %p34 = scmp.ne.s32.totalorder %s29, %s31
      %p35 = scmp.eq.s32.totalorder %s9, 0
      %p36 = por %p34, %p35
      %p37 = scmp.ne.s32.totalorder %s29, %s31
      %p38 = scmp.eq.s32.totalorder %s14, 1
      %p39 = por %p37, %p38
      %p40 = scmp.ne.s32.totalorder %s31, %s32
      %p41 = scmp.eq.s32.totalorder %s14, 0
      %p42 = por %p40, %p41
      %p43 = scmp.ne.s32.totalorder %s31, %s32
      %p44 = scmp.eq.s32.totalorder %s15, 1
      %p45 = por %p43, %p44
      %p47 = scmp.ne.s32.totalorder %s32, %s46
      %p48 = scmp.eq.s32.totalorder %s15, 0
      %p49 = por %p47, %p48
      %s50 = ssub.s32 %s16, %s28
      %s51 = ssub.s32 %s17, %s24
      %s52 = sor.u32 %s50, %s51
      %p53 = scmp.eq.s32.totalorder %s52, 0
      %s55 = sadd.s32 %s54, 1
      %s56 = scalar_select %p53, %s54, %s55
      %p59 = pneg %p53
      %p60 = scmp.eq.s32.totalorder %s9, 1
      %p61 = por %p59, %p60
      %p62 = scmp.ne.s32.totalorder %s54, %s57
      %p63 = scmp.eq.s32.totalorder %s9, 0
      %p64 = por %p62, %p63
      %p65 = scmp.ne.s32.totalorder %s54, %s57
      %p66 = scmp.eq.s32.totalorder %s14, 1
      %p67 = por %p65, %p66
      %p68 = scmp.ne.s32.totalorder %s57, %s58
      %p69 = scmp.eq.s32.totalorder %s14, 0
      %p70 = por %p68, %p69
      %p71 = scmp.ne.s32.totalorder %s57, %s58
      %p72 = scmp.eq.s32.totalorder %s15, 1
      %p73 = por %p71, %p72
      %p75 = scmp.ne.s32.totalorder %s58, %s74
      %p76 = scmp.eq.s32.totalorder %s15, 0
      %p77 = por %p75, %p76
      %s78 = ssub.s32 %s16, %s28
      %s79 = ssub.s32 %s17, %s24
      %s80 = sor.u32 %s78, %s79
      %p81 = scmp.eq.s32.totalorder %s80, 0
      %s83 = sadd.s32 %s82, 1
      %s84 = scalar_select %p81, %s82, %s83
      %p87 = pneg %p81
      %p88 = scmp.eq.s32.totalorder %s9, 1
      %p89 = por %p87, %p88
      %p90 = scmp.ne.s32.totalorder %s82, %s85
      %p91 = scmp.eq.s32.totalorder %s9, 0
      %p92 = por %p90, %p91
      %p93 = scmp.ne.s32.totalorder %s82, %s85
      %p94 = scmp.eq.s32.totalorder %s14, 1
      %p95 = por %p93, %p94
      %p96 = scmp.ne.s32.totalorder %s85, %s86
      %p97 = scmp.eq.s32.totalorder %s14, 0
      %p98 = por %p96, %p97
      %p99 = scmp.ne.s32.totalorder %s85, %s86
      %p100 = scmp.eq.s32.totalorder %s15, 1
      %p101 = por %p99, %p100
      %p103 = scmp.ne.s32.totalorder %s86, %s102
      %p104 = scmp.eq.s32.totalorder %s15, 0
      %p105 = por %p103, %p104
      %p106 = scmp.le.s32.totalorder 1, %s9
      %p107 = scmp.lt.s32.totalorder %s9, 3
      %p108 = pnand %p106, %p107
      %p109 = pneg %p108
      // Predicated region
      $region9: #{saturation_loss.1} parent=5 // pred_check
        _
      $region10: #{saturation_loss.1} parent=5 // pred_check_branch
        %111 = sbr.rel (%p108) target = $region12
      $region11: #{saturation_loss.1} parent=5 // pred_region
        %s112 = ssub.s32 %s9, 1
        // Predicated region
        $region13: #{saturation_loss.1} parent=11 // pred_check
          %p113 = pneg %p42
        $region14: #{saturation_loss.1} parent=11 // pred_check_branch
          %115 = sbr.rel (%p113) target = $region16
        $region15: #{saturation_loss.1} parent=11 // pred_region
          %s117 = ssub.s32 16, 16
          %118 = vsyncadd [#allocation3], %s117
          %s120 = sshll.u32 %s0, 4
          %s121 = int_to_ptr.vmem [resolvable:$true] %s120
          %123 = dma.vmem_to_smem %s121, 16, [#allocation2], [#allocation3]
        $region16: #{saturation_loss.1} parent=11 // pred_fallthru
          _
      $region12: #{saturation_loss.1} parent=5 // pred_fallthru
        _
      %p124 = scmp.lt.s32.totalorder %s9, 2
      // Predicated region
      $region17: #{saturation_loss.1} parent=5 // pred_check
        %p125 = pneg %p124
      $region18: #{saturation_loss.1} parent=5 // pred_check_branch
        %127 = sbr.rel (%p125) target = $region20
      $region19: #{saturation_loss.1} parent=5 // pred_region
        // Predicated region
        $region21: #{saturation_loss.1} parent=19 // pred_check
          %p128 = pneg %p64
        $region22: #{saturation_loss.1} parent=19 // pred_check_branch
          %130 = sbr.rel (%p128) target = $region24
        $region23: #{saturation_loss.1} parent=19 // pred_region
          %p131 = scmp.lt.s32.totalorder %s16, 1
          %s132 = scalar_select %p131, %s16, 1
          %p133 = scmp.lt.s32.totalorder %s17, 0
          %s134 = scalar_select %p133, %s17, 0
          %s135 = smul.addr %s132, 3
          %s136 = sadd.s32 %s134, %s135
          %s137 = smul.addr %s136, 8
          %s138 = scalar_lea.vmem %s1, %s137
        $region24: #{saturation_loss.1} parent=19 // pred_fallthru
          _
      $region20: #{saturation_loss.1} parent=5 // pred_fallthru
        _
      %p139 = scmp.le.s32.totalorder 1, %s9
      %p140 = scmp.lt.s32.totalorder %s9, 3
      %p141 = pnand %p139, %p140
      %p142 = pneg %p141
      // Predicated region
      $region25: #{saturation_loss.1} parent=5 // pred_check
        _
      $region26: #{saturation_loss.1} parent=5 // pred_check_branch
        %144 = sbr.rel (%p141) target = $region28
      $region27: #{saturation_loss.1} parent=5 // pred_region
        %s145 = ssub.s32 %s9, 1
        // Predicated region
        $region29: #{saturation_loss.1} parent=27 // pred_check
          %p146 = pneg %p42
        $region30: #{saturation_loss.1} parent=27 // pred_check_branch
          %148 = sbr.rel (%p146) target = $region32
        $region31: #{saturation_loss.1} parent=27 // pred_region
          %149 = dma.done [#allocation3], 16
        $region32: #{saturation_loss.1} parent=27 // pred_fallthru
          _
        %150 = sfence
        %p151 = pneg %p42
        %p152 = pneg %p39
        %p153 = scmp.lt.s32.totalorder %s18, 1
        %s154 = scalar_select %p153, %s18, 1
        %p155 = scmp.lt.s32.totalorder %s19, 0
        %s156 = scalar_select %p155, %s19, 0
        %s157 = smul.addr %s154, 3
        %s158 = sadd.s32 %s156, %s157
        %s159 = smul.addr %s158, 8
        %s160 = scalar_lea.vmem %s1, %s159
        %p161 = pneg %p70
        %p162 = pneg %p67
        %p163 = pneg %p98
        %p164 = pneg %p95
        %p165 = scmp.lt.s32.totalorder %s18, 1
        %s166 = scalar_select %p165, %s18, 1
        %p167 = scmp.lt.s32.totalorder %s19, 0
        %s168 = scalar_select %p167, %s19, 0
        %s169 = smul.addr %s168, 4
        %s170 = smul.addr %s166, 4
        %s171 = sadd.s32 %s169, %s170
        %s172 = smul.addr %s171, 8
        %s173 = scalar_lea.vmem %s2, %s172
        %p174 = scmp.lt.s32.totalorder %s18, 1
        %s175 = scalar_select %p174, %s18, 1
        %p176 = scmp.lt.s32.totalorder %s19, 0
        %s177 = scalar_select %p176, %s19, 0
        %s178 = smul.addr %s175, 3
        %s179 = sadd.s32 %s177, %s178
        %s180 = smul.addr %s179, 8
        %s181 = scalar_lea.vmem %s1, %s180
        %p182 = scmp.lt.s32.totalorder %s18, 1
        %s183 = scalar_select %p182, %s18, 1
        %p184 = scmp.lt.s32.totalorder %s19, 0
        %s185 = scalar_select %p184, %s19, 0
        %s186 = smul.addr %s185, 4
        %s187 = smul.addr %s183, 4
        %s188 = sadd.s32 %s186, %s187
        %s189 = smul.addr %s188, 8
        %s190 = scalar_lea.vmem %s2, %s189
        %s191 = sld [smem:[#allocation2]]
        %s192 = sld [smem:[#allocation2 + $0x1]]
        %v193 = vld [vmem:[%s181] sm:$0xff]
        %s194 = sadd.s32 0, 8
        %s195 = scalar_lea.vmem %s181, %s194
        %v196 = vld [vmem:[%s195] sm:$0xff]
        %s197 = sadd.s32 0, 16
        %s198 = scalar_lea.vmem %s181, %s197
        %v199 = vld [vmem:[%s198] sm:$0xff]
        %v200 = vsub.f32 %v193, %v196
        %v201 = vstv %s191
        %v202 = vsub.f32 %v200, %v201
        %v203 = vadd.f32 %v193, %v196
        %v204 = vmul.f32 %v203, 0.5
        %v205 = vsub.f32 %v204, %v199
        %v206 = vstv %s192
        %v207 = vsub.f32 %v205, %v206
        %v208 = vadd.f32 %v202, 0.0
        %v209 = vmul.f32 %v202, %v202
        %v210 = vadd.f32 %v209, 0.0
        %v211 = vadd.f32 %v207, 0.0
        %v212 = vmul.f32 %v207, %v207
        %v213 = vadd.f32 %v212, 0.0
        %214 = vst [vmem:[%s190] sm:$0xff] %v208
        %s215 = scalar_lea.vmem %s190, 8
        %216 = vst [vmem:[%s215] sm:$0xff] %v210
        %s217 = scalar_lea.vmem %s190, 16
        %218 = vst [vmem:[%s217] sm:$0xff] %v211
        %s219 = scalar_lea.vmem %s190, 24
        %220 = vst [vmem:[%s219] sm:$0xff] %v213
        %p221 = scmp.lt.s32.totalorder %s18, 1
        %s222 = scalar_select %p221, %s18, 1
        %p223 = scmp.lt.s32.totalorder %s19, 0
        %s224 = scalar_select %p223, %s19, 0
        %s225 = smul.addr %s224, 4
        %s226 = smul.addr %s222, 4
        %s227 = sadd.s32 %s225, %s226
        %s228 = smul.addr %s227, 8
        %s229 = scalar_lea.vmem %s2, %s228
        // Predicated region
        $region33: #{saturation_loss.1} parent=27 // pred_check
          %p230 = pneg %p95
        $region34: #{saturation_loss.1} parent=27 // pred_check_branch
          %232 = sbr.rel (%p230) target = $region36
        $region35: #{saturation_loss.1} parent=27 // pred_region
          _
        $region36: #{saturation_loss.1} parent=27 // pred_fallthru
          _
      $region28: #{saturation_loss.1} parent=5 // pred_fallthru
        _
      %p233 = scmp.le.s32.totalorder 2, %s9
      // Predicated region
      $region37: #{saturation_loss.1} parent=5 // pred_check
        %p234 = pneg %p233
      $region38: #{saturation_loss.1} parent=5 // pred_check_branch
        %236 = sbr.rel (%p234) target = $region40
      $region39: #{saturation_loss.1} parent=5 // pred_region
        %s237 = ssub.s32 %s9, 2
        // Predicated region
        $region41: #{saturation_loss.1} parent=39 // pred_check
          %p238 = pneg %p101
        $region42: #{saturation_loss.1} parent=39 // pred_check_branch
          %240 = sbr.rel (%p238) target = $region44
        $region43: #{saturation_loss.1} parent=39 // pred_region
          %p241 = scmp.lt.s32.totalorder %s20, 1
          %s242 = scalar_select %p241, %s20, 1
          %p243 = scmp.lt.s32.totalorder %s21, 0
          %s244 = scalar_select %p243, %s21, 0
          %s245 = smul.addr %s244, 4
          %s246 = smul.addr %s242, 4
          %s247 = sadd.s32 %s245, %s246
          %s248 = smul.addr %s247, 8
          %s249 = scalar_lea.vmem %s2, %s248
        $region44: #{saturation_loss.1} parent=39 // pred_fallthru
          _
      $region40: #{saturation_loss.1} parent=5 // pred_fallthru
        _
    $region6: #{saturation_loss.1} parent=1 // loop_footer
      %s13 = sadd.s32 1, %s9
    $region7: #{saturation_loss.1} parent=1 // loop_footer_branch
      %8 = sbr.rel target = $region3
    $region8: #{saturation_loss.1} parent=1 // loop_exit
      _
    %250 = vsyncpa [#allocation3], 1
    %s251 = scalar_lea.sflag [#allocation3], 1
    %252 = vsyncpa %s251, 1

</llo_original>
